<compile_context>
chip_gen: v6e
topology: v6e:2x2x1
jax: 0.10.0
libtpu: 0.0.40
codegen_flags: <defaults>
</compile_context>

<pallas_src>
import functools

import jax
import jax.numpy as jnp
from jax import lax
from jax.experimental import pallas as pl
from jax.experimental.pallas import tpu as pltpu

EPS = 1e-5
LANE = 128
SUB = 8


def _round_up(n, m):
    return ((n + m - 1) // m) * m


def _cdiv(a, b):
    return -(-a // b)


def _maybe_cast(a, dtype):
    return a if dtype is None else a.astype(dtype)


def _vmem_capacity():
    try:
        cap = int(pltpu.get_tpu_info().vmem_capacity_bytes)
        if cap > 0:
            return cap
    except Exception:
        pass
    return 64 * 1024 * 1024  # conservative fallback (v7x per-TC VMEM)


def _stream_vmem_need(tb, E, H1, H2p, O, PK, sb):
    """Rough per-stage VMEM footprint (double-buffered blocks), bytes."""
    s1 = 4 * (2 * tb * E + 2 * E * H1 + 2 * SUB * PK + 2 * SUB * H1) + 2 * tb * H1 * sb
    s2 = 2 * tb * H1 * sb + 4 * (2 * H1 * H2p + 2 * SUB * PK + 2 * SUB * H2p)
    s3 = (2 * tb * H1 * sb + 2 * tb * O * sb
          + 4 * (2 * H1 * H2p + 2 * H2p * O + 2 * SUB * PK))
    return max(s1, s2, s3)


def _padvec(v, width):
    v = jnp.asarray(v, jnp.float32).reshape(-1)
    return jnp.zeros((width,), jnp.float32).at[: v.shape[0]].set(v)


def _slab(rows, width):
    """Pack a few 1-D vectors into one lane-aligned (8, width) slab (one DMA)."""
    mat = jnp.zeros((SUB, width), jnp.float32)
    for r, v in enumerate(rows):
        mat = mat.at[r, : v.shape[0]].set(v)
    return mat


def _masked_rows(h, tile_idx, tb, n_valid, has_pad):
    """Zero padded batch rows (only the last tile can have them)."""
    if not has_pad:
        return h
    row = lax.broadcasted_iota(jnp.int32, (tb, 1), 0) + tile_idx * tb
    return jnp.where(row < n_valid, h, 0.0)


# ---------------- fused small-batch kernel (everything in VMEM) --------------
def _fused_kernel(x_ref, w1_ref, w2_ref, w3_ref, vec_ref, o_ref, *,
                  n_valid, h1, h2p, out_w, mm_dtype):
    f32 = jnp.float32
    bsz = x_ref.shape[0]
    inv_n = 1.0 / float(n_valid)
    valid = lax.broadcasted_iota(jnp.int32, (bsz, 1), 0) < n_valid

    def bn(h, gamma, beta):                      # exact two-pass batch stats
        hm = jnp.where(valid, h, 0.0)
        mean = jnp.sum(hm, axis=0, keepdims=True) * inv_n
        cent = jnp.where(valid, h - mean, 0.0)
        var = jnp.sum(cent * cent, axis=0, keepdims=True) * inv_n
        scale = gamma * lax.rsqrt(var + EPS)
        return h * scale + (beta - mean * scale)

    x = _maybe_cast(x_ref[...], mm_dtype)
    w1 = _maybe_cast(w1_ref[...], mm_dtype)
    a = jnp.maximum(jnp.dot(x, w1, preferred_element_type=f32) + vec_ref[0:1, :h1], 0.0)
    a = bn(a, vec_ref[1:2, :h1], vec_ref[2:3, :h1])

    w2 = _maybe_cast(w2_ref[...], mm_dtype)
    a = jnp.maximum(jnp.dot(_maybe_cast(a, mm_dtype), w2, preferred_element_type=f32)
                    + vec_ref[3:4, :h2p], 0.0)
    a = bn(a, vec_ref[4:5, :h2p], vec_ref[5:6, :h2p])

    w3 = _maybe_cast(w3_ref[...], mm_dtype)
    logits = (jnp.dot(_maybe_cast(a, mm_dtype), w3, preferred_element_type=f32)
              + vec_ref[6:7, :out_w])
    o_ref[...] = jax.nn.sigmoid(logits)


# -------- pass 1: Linear(emb,128)+ReLU, stream h1, accumulate BN1 stats ------
def _stage1_kernel(x_ref, w1_ref, vec_ref, h1_ref, st_ref, *,
                   n_valid, tb, tiles_per_core, h1, mm_dtype, has_pad):
    c = pl.program_id(0)
    i = pl.program_id(1)

    x = _maybe_cast(x_ref[...], mm_dtype)
    w1 = _maybe_cast(w1_ref[...], mm_dtype)
    h = jnp.dot(x, w1, preferred_element_type=jnp.float32) + vec_ref[0:1, :h1]
    h = jnp.maximum(h, 0.0)

    @pl.when(i == 0)
    def _():
        st_ref[...] = jnp.zeros_like(st_ref)

    hm = _masked_rows(h, c * tiles_per_core + i, tb, n_valid, has_pad)
    st_ref[0:1, :] += jnp.sum(hm, axis=0, keepdims=True)
    st_ref[1:2, :] += jnp.sum(hm * hm, axis=0, keepdims=True)

    h1_ref[...] = h.astype(h1_ref.dtype)          # downcast AFTER the f32 stats


# -------- pass 2 (stats only): BN1 + Linear(128,32)+ReLU -> BN2 stats --------
def _stage2_kernel(h1_ref, w2_ref, vec_ref, st_ref, *,
                   n_valid, tb, tiles_per_core, h1, h2p, mm_dtype, has_pad):
    c = pl.program_id(0)
    i = pl.program_id(1)

    scale1 = vec_ref[0:1, :h1]
    shift1 = vec_ref[1:2, :h1]
    a1 = h1_ref[...].astype(jnp.float32) * scale1 + shift1

    a1 = _maybe_cast(a1, mm_dtype)
    w2 = _maybe_cast(w2_ref[...], mm_dtype)
    h = jnp.dot(a1, w2, preferred_element_type=jnp.float32) + vec_ref[2:3, :h2p]
    h = jnp.maximum(h, 0.0)

    @pl.when(i == 0)
    def _():
        st_ref[...] = jnp.zeros_like(st_ref)

    hm = _masked_rows(h, c * tiles_per_core + i, tb, n_valid, has_pad)
    st_ref[0:1, :] += jnp.sum(hm, axis=0, keepdims=True)
    st_ref[1:2, :] += jnp.sum(hm * hm, axis=0, keepdims=True)


# -------- pass 3: BN1 + recompute h2 + BN2 + Linear(32,out) + Sigmoid --------
def _stage3_kernel(h1_ref, w2_ref, w3_ref, vec_ref, o_ref, *,
                   h1, h2p, out_w, mm_dtype):
    scale1 = vec_ref[0:1, :h1]
    shift1 = vec_ref[1:2, :h1]
    a1 = h1_ref[...].astype(jnp.float32) * scale1 + shift1

    a1 = _maybe_cast(a1, mm_dtype)
    w2 = _maybe_cast(w2_ref[...], mm_dtype)
    h2 = jnp.dot(a1, w2, preferred_element_type=jnp.float32) + vec_ref[2:3, :h2p]
    h2 = jnp.maximum(h2, 0.0)

    a2 = h2 * vec_ref[3:4, :h2p] + vec_ref[4:5, :h2p]

    a2 = _maybe_cast(a2, mm_dtype)
    w3 = _maybe_cast(w3_ref[...], mm_dtype)
    logits = jnp.dot(a2, w3, preferred_element_type=jnp.float32) + vec_ref[5:6, :out_w]
    o_ref[...] = jax.nn.sigmoid(logits).astype(o_ref.dtype)


def head_classifier(x, params, *, tb=512, matmul_dtype=jnp.bfloat16,
                    stream_dtype=jnp.bfloat16, split=1,
                    force_streaming=False, fused_bytes_limit=2 << 20):
    """x: (B, emb) float32.  params: dict from init_params (PyTorch-like shapes).

    matmul_dtype=None and stream_dtype=jnp.float32 give the exact-f32 path;
    the defaults (bf16 MXU inputs, bf16 streamed h1 / output slab) are the
    performance configuration.  split=2 shards stages 1-2 across the two v7x
    TensorCores via per-core partial statistics.
    """
    f32 = jnp.float32
    x = x.astype(f32)
    B, emb = x.shape
    H1 = params["w1"].shape[1]                    # 128
    h2_log = params["w2"].shape[1]                # 32
    out_size = params["w3"].shape[1]

    E = _round_up(emb, LANE)
    H2p = _round_up(h2_log, LANE)                 # 32  -> 128
    O = _round_up(out_size, LANE)                 # out -> >=128
    PK = max(H1, H2p, O)
    cap = _vmem_capacity()

    # Lane-padded weights (zero pad -> padded lanes stay exactly zero).
    w1p = jnp.zeros((E, H1), f32).at[:emb, :].set(params["w1"].astype(f32))
    w2p = jnp.zeros((H1, H2p), f32).at[:, :h2_log].set(params["w2"].astype(f32))
    w3p = jnp.zeros((H2p, O), f32).at[:h2_log, :out_size].set(params["w3"].astype(f32))

    b1v = _padvec(params["b1"], H1)
    g1v = _padvec(params["g1"], H1)
    be1v = _padvec(params["be1"], H1)
    b2v = _padvec(params["b2"], H2p)
    g2v = _padvec(params["g2"], H2p)
    be2v = _padvec(params["be2"], H2p)
    b3v = _padvec(params["b3"], out_size)

    # ---------------- small-batch fused fast path ----------------
    Bp_f = _round_up(B, SUB)
    fused_bytes = 4 * (Bp_f * (E + H1 + H2p + O) + E * H1 + H1 * H2p + H2p * O + SUB * PK)
    if (not force_streaming) and fused_bytes <= fused_bytes_limit:
        xp = x if (Bp_f == B and E == emb) else \
            jnp.zeros((Bp_f, E), f32).at[:B, :emb].set(x)
        vecs = _slab([b1v, g1v, be1v, b2v, g2v, be2v, b3v], PK)
        out = pl.pallas_call(
            functools.partial(_fused_kernel, n_valid=B, h1=H1, h2p=H2p,
                              out_w=O, mm_dtype=matmul_dtype),
            out_shape=jax.ShapeDtypeStruct((Bp_f, O), f32),
            compiler_params=pltpu.CompilerParams(
                vmem_limit_bytes=int(min(48 << 20, int(cap * 0.75)))),
        )(xp, w1p, w2p, w3p, vecs)
        return out[:B, :out_size]

    # ---------------- streaming path ----------------
    split = max(1, int(split))
    sb = jnp.dtype(stream_dtype).itemsize
    budget = int(cap * 0.6)

    # Tile choice: as large as the VMEM budget allows (multiple of 16 so bf16
    # blocks stay sublane-aligned), never bigger than the per-core batch.
    tb_eff = max(16, min(_round_up(tb, 16), _round_up(_cdiv(B, split), 16)))
    while _stream_vmem_need(tb_eff, E, H1, H2p, O, PK, sb) > budget and tb_eff > 16:
        tb_eff = max(16, _round_up(tb_eff // 2, 16))
    need = _stream_vmem_need(tb_eff, E, H1, H2p, O, PK, sb)
    vmem_limit = int(min(max(2 * need + (4 << 20), 32 << 20), int(cap * 0.85)))

    tpc = _cdiv(B, tb_eff * split)                # tiles per "core" (split slice)
    n_tiles = tpc * split
    B_pad = n_tiles * tb_eff
    has_pad = B_pad != B

    # Skip the padded copy of x when it is already lane/tile aligned.
    xp = x if (B_pad == B and E == emb) else \
        jnp.zeros((B_pad, E), f32).at[:B, :emb].set(x)

    acc_cp = pltpu.CompilerParams(
        dimension_semantics=("parallel", "arbitrary"), vmem_limit_bytes=vmem_limit)
    par_cp = pltpu.CompilerParams(
        dimension_semantics=("parallel",), vmem_limit_bytes=vmem_limit)

    # ---- stage 1: Linear1 + ReLU, stream h1 (stream_dtype), BN1 stats ----
    vec1 = _slab([b1v], PK)
    h1_full, st1 = pl.pallas_call(
        functools.partial(_stage1_kernel, n_valid=B, tb=tb_eff, tiles_per_core=tpc,
                          h1=H1, mm_dtype=matmul_dtype, has_pad=has_pad),
        out_shape=(jax.ShapeDtypeStruct((B_pad, H1), stream_dtype),
                   jax.ShapeDtypeStruct((split * SUB, H1), f32)),
        grid=(split, tpc),
        in_specs=[pl.BlockSpec((tb_eff, E), lambda c, i: (c * tpc + i, 0)),
                  pl.BlockSpec((E, H1), lambda c, i: (0, 0)),
                  pl.BlockSpec((SUB, PK), lambda c, i: (0, 0))],
        out_specs=(pl.BlockSpec((tb_eff, H1), lambda c, i: (c * tpc + i, 0)),
                   pl.BlockSpec((SUB, H1), lambda c, i: (c, 0))),
        compiler_params=acc_cp,
        cost_estimate=pl.CostEstimate(
            flops=2 * B_pad * E * H1, transcendentals=0,
            bytes_accessed=4 * (B_pad * E + E * H1) + sb * B_pad * H1),
    )(xp, w1p, vec1)

    # Fold BN1 into scale/shift once (plain JAX, tiny).
    st1 = st1.reshape(split, SUB, H1)
    mean1 = jnp.sum(st1[:, 0, :], axis=0) / B
    var1 = jnp.maximum(jnp.sum(st1[:, 1, :], axis=0) / B - mean1 * mean1, 0.0)
    scale1 = g1v * lax.rsqrt(var1 + EPS)
    shift1 = be1v - mean1 * scale1

    # ---- stage 2 (stats only): BN1 + Linear2 + ReLU -> BN2 stats ----
    vec2 = _slab([scale1, shift1, b2v], PK)
    st2 = pl.pallas_call(
        functools.partial(_stage2_kernel, n_valid=B, tb=tb_eff, tiles_per_core=tpc,
                          h1=H1, h2p=H2p, mm_dtype=matmul_dtype, has_pad=has_pad),
        out_shape=jax.ShapeDtypeStruct((split * SUB, H2p), f32),
        grid=(split, tpc),
        in_specs=[pl.BlockSpec((tb_eff, H1), lambda c, i: (c * tpc + i, 0)),
                  pl.BlockSpec((H1, H2p), lambda c, i: (0, 0)),
                  pl.BlockSpec((SUB, PK), lambda c, i: (0, 0))],
        out_specs=pl.BlockSpec((SUB, H2p), lambda c, i: (c, 0)),
        compiler_params=acc_cp,
        cost_estimate=pl.CostEstimate(
            flops=2 * B_pad * H1 * H2p, transcendentals=0,
            bytes_accessed=sb * B_pad * H1 + 4 * H1 * H2p),
    )(h1_full, w2p, vec2)

    st2 = st2.reshape(split, SUB, H2p)
    mean2 = jnp.sum(st2[:, 0, :], axis=0) / B
    var2 = jnp.maximum(jnp.sum(st2[:, 1, :], axis=0) / B - mean2 * mean2, 0.0)
    scale2 = g2v * lax.rsqrt(var2 + EPS)          # padded lanes: gamma=0 -> scale=0
    shift2 = be2v - mean2 * scale2

    # ---- stage 3: BN1 + recompute h2 + BN2 + Linear3 + sigmoid ----
    vec3 = _slab([scale1, shift1, b2v, scale2, shift2, b3v], PK)
    out_pad = pl.pallas_call(
        functools.partial(_stage3_kernel, h1=H1, h2p=H2p, out_w=O,
                          mm_dtype=matmul_dtype),
        out_shape=jax.ShapeDtypeStruct((B_pad, O), stream_dtype),
        grid=(n_tiles,),
        in_specs=[pl.BlockSpec((tb_eff, H1), lambda i: (i, 0)),
                  pl.BlockSpec((H1, H2p), lambda i: (0, 0)),
                  pl.BlockSpec((H2p, O), lambda i: (0, 0)),
                  pl.BlockSpec((SUB, PK), lambda i: (0, 0))],
        out_specs=pl.BlockSpec((tb_eff, O), lambda i: (i, 0)),
        compiler_params=par_cp,
        cost_estimate=pl.CostEstimate(
            flops=2 * B_pad * (H1 * H2p + H2p * O),
            transcendentals=B_pad * O,
            bytes_accessed=sb * B_pad * (H1 + O) + 4 * (H1 * H2p + H2p * O)),
    )(h1_full, w2p, w3p, vec3)

    return out_pad[:B, :out_size].astype(f32)


def init_params(key, emb_size, out_size):
    """Deterministic synthetic parameters (PyTorch-like init, stored as (in,out))."""
    k1, k2, k3, k4, k5, k6 = jax.random.split(key, 6)

    def lin(kw, kb, fan_in, fan_out):
        bound = 1.0 / jnp.sqrt(fan_in)
        w = jax.random.uniform(kw, (fan_in, fan_out), jnp.float32, -bound, bound)
        b = jax.random.uniform(kb, (1, fan_out), jnp.float32, -bound, bound)
        return w, b

    w1, b1 = lin(k1, k2, emb_size, 128)
    w2, b2 = lin(k3, k4, 128, 32)
    w3, b3 = lin(k5, k6, 32, out_size)
    return {
        "w1": w1, "b1": b1,
        "g1": jnp.ones((1, 128), jnp.float32), "be1": jnp.zeros((1, 128), jnp.float32),
        "w2": w2, "b2": b2,
        "g2": jnp.ones((1, 32), jnp.float32), "be2": jnp.zeros((1, 32), jnp.float32),
        "w3": w3, "b3": b3,
    }


def head_classifier_ref(x, params):
    """Pure-JAX f32 reference (PyTorch train-mode BN forward)."""
    h = jnp.dot(x, params["w1"]) + params["b1"]
    h = jnp.maximum(h, 0.0)
    m = h.mean(0, keepdims=True)
    v = ((h - m) ** 2).mean(0, keepdims=True)
    h = (h - m) / jnp.sqrt(v + EPS) * params["g1"] + params["be1"]

    h = jnp.dot(h, params["w2"]) + params["b2"]
    h = jnp.maximum(h, 0.0)
    m = h.mean(0, keepdims=True)
    v = ((h - m) ** 2).mean(0, keepdims=True)
    h = (h - m) / jnp.sqrt(v + EPS) * params["g2"] + params["be2"]

    return jax.nn.sigmoid(jnp.dot(h, params["w3"]) + params["b3"])


if __name__ == "__main__":
    key = jax.random.PRNGKey(0)
    kx, kp = jax.random.split(key)

    batch, emb_size, out_size = 20, 32, 8   # non-multiple batch exercises masking
    x = jax.random.normal(kx, (batch, emb_size), jnp.float32)
    params = init_params(kp, emb_size, out_size)
    ref = head_classifier_ref(x, params)

    # 1) small-batch fused fast path, exact f32 math.
    out_fused = jax.block_until_ready(head_classifier(x, params, matmul_dtype=None))
    assert out_fused.shape == (batch, out_size)
    assert jnp.allclose(out_fused, ref, atol=5e-4, rtol=5e-4), "fused f32 mismatch"

    # 2) streaming path, exact f32 (tb=16 -> multi-tile stats accumulation + pad mask).
    out_s = jax.block_until_ready(head_classifier(
        x, params, tb=16, matmul_dtype=None, stream_dtype=jnp.float32,
        force_streaming=True))
    assert jnp.allclose(out_s, ref, atol=5e-4, rtol=5e-4), "streamed f32 mismatch"

    # 3) streaming perf defaults (bf16 stream + bf16 MXU) with the v7x-style
    #    2-way core split (per-core partial BN stats merged in the wrapper).
    out_b = jax.block_until_ready(head_classifier(
        x, params, tb=16, split=2, force_streaming=True))
    assert jnp.allclose(out_b, ref, atol=5e-2, rtol=5e-2), "streamed bf16 mismatch"

    print("KERNEL_OK")
</pallas_src>

<mosaic_0001>
module attributes {stable_mosaic.version = 11 : i64} {
  func.func @_fused_kernel(%arg0: memref<24x128xf32, #tpu.memory_space<vmem>>, %arg1: memref<128x128xf32, #tpu.memory_space<vmem>>, %arg2: memref<128x128xf32, #tpu.memory_space<vmem>>, %arg3: memref<128x128xf32, #tpu.memory_space<vmem>>, %arg4: memref<8x128xf32, #tpu.memory_space<vmem>>, %arg5: memref<24x128xf32, #tpu.memory_space<vmem>>) attributes {dimension_semantics = [], scalar_prefetch = 0 : i64, scratch_operands = 0 : i64, tpu.core_type = #tpu.core_type<tc>} {
    %0 = tpu.iota {dimensions = array<i32: 0>} : vector<24x1xi32>
    %c20_i32 = arith.constant 20 : i32
    %1 = vector.broadcast %c20_i32 : i32 to vector<24x1xi32>
    %2 = arith.cmpi slt, %0, %1 : vector<24x1xi32>
    %c0 = arith.constant 0 : index
    %c0_0 = arith.constant 0 : index
    %3 = vector.load %arg0[%c0, %c0_0] : memref<24x128xf32, #tpu.memory_space<vmem>>, vector<24x128xf32>
    %c0_1 = arith.constant 0 : index
    %c0_2 = arith.constant 0 : index
    %4 = vector.load %arg1[%c0_1, %c0_2] : memref<128x128xf32, #tpu.memory_space<vmem>>, vector<128x128xf32>
    %cst = arith.constant dense<0.000000e+00> : vector<24x128xf32>
    %5 = tpu.matmul %3, %4, %cst {dimension_numbers = #tpu.dot_dimension_numbers<[1], [0], [0], [1], [0, 0, 1, 1], [], []>} : vector<24x128xf32>, vector<128x128xf32>, vector<24x128xf32> -> vector<24x128xf32>
    %c0_3 = arith.constant 0 : index
    %c0_4 = arith.constant 0 : index
    %6 = vector.load %arg4[%c0_3, %c0_4] : memref<8x128xf32, #tpu.memory_space<vmem>>, vector<1x128xf32>
    %7 = vector.broadcast %6 : vector<1x128xf32> to vector<24x128xf32>
    %8 = arith.addf %5, %7 : vector<24x128xf32>
    %cst_5 = arith.constant 0.000000e+00 : f32
    %9 = vector.broadcast %cst_5 : f32 to vector<24x128xf32>
    %10 = arith.maximumf %8, %9 : vector<24x128xf32>
    %c1 = arith.constant 1 : index
    %c0_6 = arith.constant 0 : index
    %11 = vector.load %arg4[%c1, %c0_6] : memref<8x128xf32, #tpu.memory_space<vmem>>, vector<1x128xf32>
    %c2 = arith.constant 2 : index
    %c0_7 = arith.constant 0 : index
    %12 = vector.load %arg4[%c2, %c0_7] : memref<8x128xf32, #tpu.memory_space<vmem>>, vector<1x128xf32>
    %cst_8 = arith.constant 0.000000e+00 : f32
    %13 = vector.shape_cast %2 : vector<24x1xi1> to vector<24x1xi1>
    %14 = vector.broadcast %13 : vector<24x1xi1> to vector<24x128xi1>
    %15 = vector.broadcast %cst_8 : f32 to vector<24x128xf32>
    %16 = arith.select %14, %10, %15 : vector<24x128xi1>, vector<24x128xf32>
    %cst_9 = arith.constant dense<0.000000e+00> : vector<128xf32>
    %17 = vector.multi_reduction <add>, %16, %cst_9 [0] : vector<24x128xf32> to vector<128xf32>
    %18 = vector.shape_cast %17 : vector<128xf32> to vector<1x128xf32>
    %cst_10 = arith.constant 5.000000e-02 : f32
    %19 = vector.broadcast %cst_10 : f32 to vector<1x128xf32>
    %20 = arith.mulf %18, %19 : vector<1x128xf32>
    %21 = vector.broadcast %20 : vector<1x128xf32> to vector<24x128xf32>
    %22 = arith.subf %10, %21 : vector<24x128xf32>
    %cst_11 = arith.constant 0.000000e+00 : f32
    %23 = vector.shape_cast %2 : vector<24x1xi1> to vector<24x1xi1>
    %24 = vector.broadcast %23 : vector<24x1xi1> to vector<24x128xi1>
    %25 = vector.broadcast %cst_11 : f32 to vector<24x128xf32>
    %26 = arith.select %24, %22, %25 : vector<24x128xi1>, vector<24x128xf32>
    %27 = arith.mulf %26, %26 : vector<24x128xf32>
    %cst_12 = arith.constant dense<0.000000e+00> : vector<128xf32>
    %28 = vector.multi_reduction <add>, %27, %cst_12 [0] : vector<24x128xf32> to vector<128xf32>
    %29 = vector.shape_cast %28 : vector<128xf32> to vector<1x128xf32>
    %cst_13 = arith.constant 5.000000e-02 : f32
    %30 = vector.broadcast %cst_13 : f32 to vector<1x128xf32>
    %31 = arith.mulf %29, %30 : vector<1x128xf32>
    %cst_14 = arith.constant 9.99999974E-6 : f32
    %32 = vector.broadcast %cst_14 : f32 to vector<1x128xf32>
    %33 = arith.addf %31, %32 : vector<1x128xf32>
    %34 = math.rsqrt %33 : vector<1x128xf32>
    %35 = arith.mulf %11, %34 : vector<1x128xf32>
    %36 = vector.broadcast %35 : vector<1x128xf32> to vector<24x128xf32>
    %37 = arith.mulf %10, %36 : vector<24x128xf32>
    %38 = arith.mulf %20, %35 : vector<1x128xf32>
    %39 = arith.subf %12, %38 : vector<1x128xf32>
    %40 = vector.broadcast %39 : vector<1x128xf32> to vector<24x128xf32>
    %41 = arith.addf %37, %40 : vector<24x128xf32>
    %c0_15 = arith.constant 0 : index
    %c0_16 = arith.constant 0 : index
    %42 = vector.load %arg2[%c0_15, %c0_16] : memref<128x128xf32, #tpu.memory_space<vmem>>, vector<128x128xf32>
    %cst_17 = arith.constant dense<0.000000e+00> : vector<24x128xf32>
    %43 = tpu.matmul %41, %42, %cst_17 {dimension_numbers = #tpu.dot_dimension_numbers<[1], [0], [0], [1], [0, 0, 1, 1], [], []>} : vector<24x128xf32>, vector<128x128xf32>, vector<24x128xf32> -> vector<24x128xf32>
    %c3 = arith.constant 3 : index
    %c0_18 = arith.constant 0 : index
    %44 = vector.load %arg4[%c3, %c0_18] : memref<8x128xf32, #tpu.memory_space<vmem>>, vector<1x128xf32>
    %45 = vector.broadcast %44 : vector<1x128xf32> to vector<24x128xf32>
    %46 = arith.addf %43, %45 : vector<24x128xf32>
    %cst_19 = arith.constant 0.000000e+00 : f32
    %47 = vector.broadcast %cst_19 : f32 to vector<24x128xf32>
    %48 = arith.maximumf %46, %47 : vector<24x128xf32>
    %c4 = arith.constant 4 : index
    %c0_20 = arith.constant 0 : index
    %49 = vector.load %arg4[%c4, %c0_20] : memref<8x128xf32, #tpu.memory_space<vmem>>, vector<1x128xf32>
    %c5 = arith.constant 5 : index
    %c0_21 = arith.constant 0 : index
    %50 = vector.load %arg4[%c5, %c0_21] : memref<8x128xf32, #tpu.memory_space<vmem>>, vector<1x128xf32>
    %cst_22 = arith.constant 0.000000e+00 : f32
    %51 = vector.shape_cast %2 : vector<24x1xi1> to vector<24x1xi1>
    %52 = vector.broadcast %51 : vector<24x1xi1> to vector<24x128xi1>
    %53 = vector.broadcast %cst_22 : f32 to vector<24x128xf32>
    %54 = arith.select %52, %48, %53 : vector<24x128xi1>, vector<24x128xf32>
    %cst_23 = arith.constant dense<0.000000e+00> : vector<128xf32>
    %55 = vector.multi_reduction <add>, %54, %cst_23 [0] : vector<24x128xf32> to vector<128xf32>
    %56 = vector.shape_cast %55 : vector<128xf32> to vector<1x128xf32>
    %cst_24 = arith.constant 5.000000e-02 : f32
    %57 = vector.broadcast %cst_24 : f32 to vector<1x128xf32>
    %58 = arith.mulf %56, %57 : vector<1x128xf32>
    %59 = vector.broadcast %58 : vector<1x128xf32> to vector<24x128xf32>
    %60 = arith.subf %48, %59 : vector<24x128xf32>
    %cst_25 = arith.constant 0.000000e+00 : f32
    %61 = vector.shape_cast %2 : vector<24x1xi1> to vector<24x1xi1>
    %62 = vector.broadcast %61 : vector<24x1xi1> to vector<24x128xi1>
    %63 = vector.broadcast %cst_25 : f32 to vector<24x128xf32>
    %64 = arith.select %62, %60, %63 : vector<24x128xi1>, vector<24x128xf32>
    %65 = arith.mulf %64, %64 : vector<24x128xf32>
    %cst_26 = arith.constant dense<0.000000e+00> : vector<128xf32>
    %66 = vector.multi_reduction <add>, %65, %cst_26 [0] : vector<24x128xf32> to vector<128xf32>
    %67 = vector.shape_cast %66 : vector<128xf32> to vector<1x128xf32>
    %cst_27 = arith.constant 5.000000e-02 : f32
    %68 = vector.broadcast %cst_27 : f32 to vector<1x128xf32>
    %69 = arith.mulf %67, %68 : vector<1x128xf32>
    %cst_28 = arith.constant 9.99999974E-6 : f32
    %70 = vector.broadcast %cst_28 : f32 to vector<1x128xf32>
    %71 = arith.addf %69, %70 : vector<1x128xf32>
    %72 = math.rsqrt %71 : vector<1x128xf32>
    %73 = arith.mulf %49, %72 : vector<1x128xf32>
    %74 = vector.broadcast %73 : vector<1x128xf32> to vector<24x128xf32>
    %75 = arith.mulf %48, %74 : vector<24x128xf32>
    %76 = arith.mulf %58, %73 : vector<1x128xf32>
    %77 = arith.subf %50, %76 : vector<1x128xf32>
    %78 = vector.broadcast %77 : vector<1x128xf32> to vector<24x128xf32>
    %79 = arith.addf %75, %78 : vector<24x128xf32>
    %c0_29 = arith.constant 0 : index
    %c0_30 = arith.constant 0 : index
    %80 = vector.load %arg3[%c0_29, %c0_30] : memref<128x128xf32, #tpu.memory_space<vmem>>, vector<128x128xf32>
    %cst_31 = arith.constant dense<0.000000e+00> : vector<24x128xf32>
    %81 = tpu.matmul %79, %80, %cst_31 {dimension_numbers = #tpu.dot_dimension_numbers<[1], [0], [0], [1], [0, 0, 1, 1], [], []>} : vector<24x128xf32>, vector<128x128xf32>, vector<24x128xf32> -> vector<24x128xf32>
    %c6 = arith.constant 6 : index
    %c0_32 = arith.constant 0 : index
    %82 = vector.load %arg4[%c6, %c0_32] : memref<8x128xf32, #tpu.memory_space<vmem>>, vector<1x128xf32>
    %83 = vector.broadcast %82 : vector<1x128xf32> to vector<24x128xf32>
    %84 = arith.addf %81, %83 : vector<24x128xf32>
    %85 = arith.negf %84 : vector<24x128xf32>
    %86 = math.exp %85 : vector<24x128xf32>
    %cst_33 = arith.constant 1.000000e+00 : f32
    %87 = vector.broadcast %cst_33 : f32 to vector<24x128xf32>
    %88 = arith.addf %87, %86 : vector<24x128xf32>
    %89 = arith.divf %87, %88 : vector<24x128xf32>
    %c0_34 = arith.constant 0 : index
    %c0_35 = arith.constant 0 : index
    %90 = vector.load %arg5[%c0_34, %c0_35] : memref<24x128xf32, #tpu.memory_space<vmem>>, vector<24x128xf32>
    tpu.vector_store %arg5[%c0_34, %c0_35], %89 {strides = array<i32>} : memref<24x128xf32, #tpu.memory_space<vmem>>, vector<24x128xf32>,
    return
  }
}

</mosaic_0001>

<llo_original>
// kernel: tpu_custom_call.1
$region0: #{tpu_custom_call.1}
  #allocation0 [shape = 'u32[]', space=smem, size = 0x4, offset = 0x4, fixed_abs, tag = 'smem constant byte address 0x4 - core index']
  #allocation1 [shape = 'u32[144,128]{1,0:T(1,128)}', space=vmem, size = 0x12000, scoped, tag = 'internal scratch']
  %s0 = inlined_call_operand.hbm [shape: f32[24,128], index: 0, kind: input, shape index: {}]
  %s1 = inlined_call_operand.hbm [shape: f32[128,128], index: 1, kind: input, shape index: {}]
  %s2 = inlined_call_operand.hbm [shape: f32[128,128], index: 2, kind: input, shape index: {}]
  %s3 = inlined_call_operand.hbm [shape: f32[128,128], index: 3, kind: input, shape index: {}]
  %s4 = inlined_call_operand.hbm [shape: f32[8,128], index: 4, kind: input, shape index: {}]
  %s5 = inlined_call_operand.hbm [shape: f32[24,128], index: 5, kind: output, shape index: {}]
  %s6 = sld [smem:[#allocation0]]
  $region50: #{tpu_custom_call.1} parent=0
    _
  %s8 = ssub.s32 1, %s6
  %s9 = scalar_select 0, %s8, %s6
  $region1: #{tpu_custom_call.1} parent=0
    #allocation2 [shape = 'u8[12288]{0}', space=vmem, size = 0x3000, scoped, tag = 'input window, operand 0, single buffered']
    #allocation3 [shape = 's32[1]{0}', space=sflag, size = 0x4, scoped, tag = 'scoped memory for tpu_custom_call.1']
    #allocation4 [shape = 's32[1]{0}', space=sflag, size = 0x4, scoped, tag = 'scoped memory for tpu_custom_call.1']
    #allocation5 [shape = 'u8[65536]{0}', space=vmem, size = 0x10000, scoped, tag = 'input window, operand 1, single buffered']
    #allocation6 [shape = 's32[1]{0}', space=sflag, size = 0x4, scoped, tag = 'scoped memory for tpu_custom_call.1']
    #allocation7 [shape = 'u8[65536]{0}', space=vmem, size = 0x10000, scoped, tag = 'input window, operand 2, single buffered']
    #allocation8 [shape = 'u8[65536]{0}', space=vmem, size = 0x10000, scoped, tag = 'input window, operand 3, single buffered']
    #allocation9 [shape = 's32[1]{0}', space=sflag, size = 0x4, scoped, tag = 'scoped memory for tpu_custom_call.1']
    #allocation10 [shape = 'u8[4096]{0}', space=vmem, size = 0x1000, scoped, tag = 'input window, operand 4, single buffered']
    #allocation11 [shape = 'u8[12288]{0}', space=vmem, size = 0x3000, scoped, tag = 'output window, operand 0, single buffered']
    %10 = vsyncpa [#allocation3], 0
    %11 = vsyncpa [#allocation6], 0
    %12 = vsyncpa [#allocation9], 0
    %13 = vsyncpa [#allocation4], 0
    // Predicated region
    $region2: #{tpu_custom_call.1} parent=1 // pred_check
      _
    $region3: #{tpu_custom_call.1} parent=1 // pred_check_branch
      %15 = sbr.rel (0) target = $region5
    $region4: #{tpu_custom_call.1} parent=1 // pred_region
      %s17 = ssub.s32 384, 384
      %18 = vsyncadd [#allocation3], %s17
      %s19 = sshll.u32 [#allocation2], 4
      %s20 = int_to_ptr.vmem [resolvable:$true] %s19
      %25 = dma.hbm_to_vmem [thread:$0]  %s0, 384, %s20, [#allocation3], 128, 128, 8
    $region5: #{tpu_custom_call.1} parent=1 // pred_fallthru
      _
    // Predicated region
    $region6: #{tpu_custom_call.1} parent=1 // pred_check
      _
    $region7: #{tpu_custom_call.1} parent=1 // pred_check_branch
      %27 = sbr.rel (0) target = $region9
    $region8: #{tpu_custom_call.1} parent=1 // pred_region
      %s29 = ssub.s32 2048, 2048
      %30 = vsyncadd [#allocation6], %s29
      %s31 = sshll.u32 [#allocation5], 4
      %s32 = int_to_ptr.vmem [resolvable:$true] %s31
      %37 = dma.hbm_to_vmem [thread:$0]  %s1, 2048, %s32, [#allocation6], 128, 128, 8
    $region9: #{tpu_custom_call.1} parent=1 // pred_fallthru
      _
    // Predicated region
    $region10: #{tpu_custom_call.1} parent=1 // pred_check
      _
    $region11: #{tpu_custom_call.1} parent=1 // pred_check_branch
      %39 = sbr.rel (0) target = $region13
    $region12: #{tpu_custom_call.1} parent=1 // pred_region
      %s41 = ssub.s32 2048, 2048
      %42 = vsyncadd [#allocation6], %s41
      %s43 = sshll.u32 [#allocation7], 4
      %s44 = int_to_ptr.vmem [resolvable:$true] %s43
      %49 = dma.hbm_to_vmem [thread:$0]  %s2, 2048, %s44, [#allocation6], 128, 128, 8
    $region13: #{tpu_custom_call.1} parent=1 // pred_fallthru
      _
    // Predicated region
    $region14: #{tpu_custom_call.1} parent=1 // pred_check
      _
    $region15: #{tpu_custom_call.1} parent=1 // pred_check_branch
      %51 = sbr.rel (0) target = $region17
    $region16: #{tpu_custom_call.1} parent=1 // pred_region
      %s53 = ssub.s32 2048, 2048
      %54 = vsyncadd [#allocation9], %s53
      %s55 = sshll.u32 [#allocation8], 4
      %s56 = int_to_ptr.vmem [resolvable:$true] %s55
      %61 = dma.hbm_to_vmem [thread:$0]  %s3, 2048, %s56, [#allocation9], 128, 128, 8
    $region17: #{tpu_custom_call.1} parent=1 // pred_fallthru
      _
    // Predicated region
    $region18: #{tpu_custom_call.1} parent=1 // pred_check
      _
    $region19: #{tpu_custom_call.1} parent=1 // pred_check_branch
      %63 = sbr.rel (0) target = $region21
    $region20: #{tpu_custom_call.1} parent=1 // pred_region
      %s65 = ssub.s32 128, 128
      %66 = vsyncadd [#allocation9], %s65
      %s68 = sshll.u32 [#allocation10], 4
      %s69 = int_to_ptr.vmem [resolvable:$true] %s68
      %71 = dma.hbm_to_vmem [thread:$0]  %s4, 128, %s69, [#allocation9]
    $region21: #{tpu_custom_call.1} parent=1 // pred_fallthru
      _
    // Predicated region
    $region22: #{tpu_custom_call.1} parent=1 // pred_check
      _
    $region23: #{tpu_custom_call.1} parent=1 // pred_check_branch
      %73 = sbr.rel (0) target = $region25
    $region24: #{tpu_custom_call.1} parent=1 // pred_region
      %74 = dma.done [#allocation3], 384
    $region25: #{tpu_custom_call.1} parent=1 // pred_fallthru
      _
    // Predicated region
    $region26: #{tpu_custom_call.1} parent=1 // pred_check
      _
    $region27: #{tpu_custom_call.1} parent=1 // pred_check_branch
      %76 = sbr.rel (0) target = $region29
    $region28: #{tpu_custom_call.1} parent=1 // pred_region
      %77 = dma.done [#allocation6], 2048
    $region29: #{tpu_custom_call.1} parent=1 // pred_fallthru
      _
    // Predicated region
    $region30: #{tpu_custom_call.1} parent=1 // pred_check
      _
    $region31: #{tpu_custom_call.1} parent=1 // pred_check_branch
      %79 = sbr.rel (0) target = $region33
    $region32: #{tpu_custom_call.1} parent=1 // pred_region
      %80 = dma.done [#allocation6], 2048
    $region33: #{tpu_custom_call.1} parent=1 // pred_fallthru
      _
    // Predicated region
    $region34: #{tpu_custom_call.1} parent=1 // pred_check
      _
    $region35: #{tpu_custom_call.1} parent=1 // pred_check_branch
      %82 = sbr.rel (0) target = $region37
    $region36: #{tpu_custom_call.1} parent=1 // pred_region
      %83 = dma.done [#allocation9], 2048
    $region37: #{tpu_custom_call.1} parent=1 // pred_fallthru
      _
    // Predicated region
    $region38: #{tpu_custom_call.1} parent=1 // pred_check
      _
    $region39: #{tpu_custom_call.1} parent=1 // pred_check_branch
      %85 = sbr.rel (0) target = $region41
    $region40: #{tpu_custom_call.1} parent=1 // pred_region
      %86 = dma.done [#allocation9], 128
    $region41: #{tpu_custom_call.1} parent=1 // pred_fallthru
      _
    %v87 = vlaneseq
    %v88 = vshrl.u32 %v87, 7
    %v89 = vadd.s32 %v88, 8
    %v90 = vadd.s32 %v88, 16
    %vm91 = vcmp.lt.s32.totalorder %v88, 20
    %vm92 = vcmp.lt.s32.totalorder %v89, 20
    %vm93 = vcmp.lt.s32.totalorder %v90, 20
    %v94 = vld [vmem:[#allocation2] sm:$0xff]
    %v95 = vld [vmem:[#allocation2 + $0x8] sm:$0xff]
    %v96 = vld [vmem:[#allocation2 + $0x10] sm:$0xff]
    %v97 = vld [vmem:[#allocation5] sm:$0xff]
    %v98 = vld [vmem:[#allocation5 + $0x8] sm:$0xff]
    %v99 = vld [vmem:[#allocation5 + $0x10] sm:$0xff]
    %v100 = vld [vmem:[#allocation5 + $0x18] sm:$0xff]
    %v101 = vld [vmem:[#allocation5 + $0x20] sm:$0xff]
    %v102 = vld [vmem:[#allocation5 + $0x28] sm:$0xff]
    %v103 = vld [vmem:[#allocation5 + $0x30] sm:$0xff]
    %v104 = vld [vmem:[#allocation5 + $0x38] sm:$0xff]
    %v105 = vld [vmem:[#allocation5 + $0x40] sm:$0xff]
    %v106 = vld [vmem:[#allocation5 + $0x48] sm:$0xff]
    %v107 = vld [vmem:[#allocation5 + $0x50] sm:$0xff]
    %v108 = vld [vmem:[#allocation5 + $0x58] sm:$0xff]
    %v109 = vld [vmem:[#allocation5 + $0x60] sm:$0xff]
    %v110 = vld [vmem:[#allocation5 + $0x68] sm:$0xff]
    %v111 = vld [vmem:[#allocation5 + $0x70] sm:$0xff]
    %v112 = vld [vmem:[#allocation5 + $0x78] sm:$0xff]
    %v113 = vld [vmem:[#allocation10] sm:$0x1]
    %v114 = vlaneseq
    %v115 = vshrl.u32 %v114, 7
    %v116 = vsub.s32 0, %v115
    %v117 = vrot.slane %v113, %v116
    %118 = vmatprep.subr.mxu0 0.0
    %119 = vmatpush1.msra.mxu0 %v112
    %120 = vmatprep.subr.mxu0 0.0
    %121 = vmatpush1.msra.mxu0 %v111
    %122 = vmatprep.subr.mxu0 0.0
    %123 = vmatpush1.msra.mxu0 %v110
    %124 = vmatprep.subr.mxu0 0.0
    %125 = vmatpush1.msra.mxu0 %v109
    %126 = vmatprep.subr.mxu0 0.0
    %127 = vmatpush1.msra.mxu0 %v108
    %128 = vmatprep.subr.mxu0 0.0
    %129 = vmatpush1.msra.mxu0 %v107
    %130 = vmatprep.subr.mxu0 0.0
    %131 = vmatpush1.msra.mxu0 %v106
    %132 = vmatprep.subr.mxu0 0.0
    %133 = vmatpush1.msra.mxu0 %v105
    %134 = vmatprep.subr.mxu0 0.0
    %135 = vmatpush1.msra.mxu0 %v104
    %136 = vmatprep.subr.mxu0 0.0
    %137 = vmatpush1.msra.mxu0 %v103
    %138 = vmatprep.subr.mxu0 0.0
    %139 = vmatpush1.msra.mxu0 %v102
    %140 = vmatprep.subr.mxu0 0.0
    %141 = vmatpush1.msra.mxu0 %v101
    %142 = vmatprep.subr.mxu0 0.0
    %143 = vmatpush1.msra.mxu0 %v100
    %144 = vmatprep.subr.mxu0 0.0
    %145 = vmatpush1.msra.mxu0 %v99
    %146 = vmatprep.subr.mxu0 0.0
    %147 = vmatpush1.msra.mxu0 %v98
    %148 = vmatprep.subr.mxu0 0.0
    %149 = vmatpush1.msra.mxu0 %v97
    %150 = vmatprep.subr.mxu0 0.0
    %151 = vmatpush2.msra.mxu0 0.0
    %152 = vmatprep.subr.mxu0 0.0
    %153 = vmatpush2.msra.mxu0 0.0
    %154 = vmatprep.subr.mxu0 0.0
    %155 = vmatpush2.msra.mxu0 0.0
    %156 = vmatprep.subr.mxu0 0.0
    %157 = vmatpush2.msra.mxu0 0.0
    %158 = vmatprep.subr.mxu0 0.0
    %159 = vmatpush2.msra.mxu0 0.0
    %160 = vmatprep.subr.mxu0 0.0
    %161 = vmatpush2.msra.mxu0 0.0
    %162 = vmatprep.subr.mxu0 0.0
    %163 = vmatpush2.msra.mxu0 0.0
    %164 = vmatprep.subr.mxu0 0.0
    %165 = vmatpush2.msra.mxu0 0.0
    %166 = vmatprep.subr.mxu0 0.0
    %167 = vmatpush2.msra.mxu0 0.0
    %168 = vmatprep.subr.mxu0 0.0
    %169 = vmatpush2.msra.mxu0 0.0
    %170 = vmatprep.subr.mxu0 0.0
    %171 = vmatpush2.msra.mxu0 0.0
    %172 = vmatprep.subr.mxu0 0.0
    %173 = vmatpush2.msra.mxu0 0.0
    %174 = vmatprep.subr.mxu0 0.0
    %175 = vmatpush2.msra.mxu0 0.0
    %176 = vmatprep.subr.mxu0 0.0
    %177 = vmatpush2.msra.mxu0 0.0
    %178 = vmatprep.subr.mxu0 0.0
    %179 = vmatpush2.msra.mxu0 0.0
    %180 = vmatprep.subr.mxu0 0.0
    %181 = vmatpush2.msra.mxu0 0.0
    %182 = vmatprep.mubr.f32.mxu0 0.0
    %183 = vmatmul.mubr.f32.gmra.mxu0 %v94
    %v184 = vpop.f32.mrf.mxu0
    %v185 = vadd.f32 %v117, %v184
    %v186 = vpop.f32.mrf.mxu0
    %187 = vmatprep.mubr.f32.mxu0 0.0
    %188 = vmatmul.mubr.f32.gmra.mxu0 %v95
    %v189 = vpop.f32.mrf.mxu0
    %v190 = vadd.f32 %v117, %v189
    %v191 = vpop.f32.mrf.mxu0
    %192 = vmatprep.mubr.f32.mxu0 0.0
    %193 = vmatmul.mubr.f32.gmra.mxu0 %v96
    %v194 = vpop.f32.mrf.mxu0
    %v195 = vadd.f32 %v117, %v194
    %v196 = vpop.f32.mrf.mxu0
    %197 = vdwg.mxu0
    %v198 = vmax.f32 %v185, 0.0
    %v199 = vmax.f32 %v190, 0.0
    %v200 = vmax.f32 %v195, 0.0
    %v201 = vld [vmem:[#allocation10 + $0x1] sm:$0x1]
    %v202 = vld [vmem:[#allocation10 + $0x2] sm:$0x1]
    %v203 = vsel %vm91, 1, 0
    %v204 = vsel %vm92, 1, 0
    %v205 = vsel %vm93, 1, 0
    %vm206 = vcmp.eq.s32.totalorder %v203, 1
    %vm207 = vcmp.eq.s32.totalorder %v204, 1
    %vm208 = vcmp.eq.s32.totalorder %v205, 1
    %v209 = vsel %vm206, %v198, 0.0
    %v210 = vsel %vm207, %v199, 0.0
    %v211 = vsel %vm208, %v200, 0.0
    %v212 = vadd.f32 %v209, %v210
    %v213 = vadd.f32 %v212, %v211
    %v214 = vrot.slane %v213, 4
    %v215 = vadd.f32 %v213, %v214
    %v216 = vrot.slane %v215, 2
    %v217 = vadd.f32 %v215, %v216
    %v218 = vrot.slane %v217, 1
    %v219 = vadd.f32 %v217, %v218
    %v220 = vmul.f32 %v219, 0.05
    %v221 = vsub.f32 %v198, %v220
    %v222 = vsub.f32 %v199, %v220
    %v223 = vsub.f32 %v200, %v220
    %v224 = vsel %vm206, %v221, 0.0
    %v225 = vsel %vm207, %v222, 0.0
    %v226 = vsel %vm208, %v223, 0.0
    %v227 = vmul.f32 %v224, %v224
    %v228 = vmul.f32 %v225, %v225
    %v229 = vmul.f32 %v226, %v226
    %v230 = vadd.f32 %v227, %v228
    %v231 = vadd.f32 %v230, %v229
    %v232 = vrot.slane %v231, 4
    %v233 = vadd.f32 %v231, %v232
    %v234 = vrot.slane %v233, 2
    %v235 = vadd.f32 %v233, %v234
    %v236 = vrot.slane %v235, 1
    %v237 = vadd.f32 %v235, %v236
    %v238 = vmul.f32 %v237, 0.05
    %v239 = vadd.f32 %v238, 1e-05
    %v240 = vrsqrt.pop %v239
    %v241 = vmul.f32 %v201, %v240
    %v242 = vlaneseq
    %v243 = vshrl.u32 %v242, 7
    %v244 = vsub.s32 0, %v243
    %v245 = vrot.slane %v241, %v244
    %v246 = vmul.f32 %v198, %v245
    %v247 = vmul.f32 %v199, %v245
    %v248 = vmul.f32 %v200, %v245
    %v249 = vmul.f32 %v220, %v241
    %v250 = vsub.f32 %v202, %v249
    %v251 = vlaneseq
    %v252 = vshrl.u32 %v251, 7
    %v253 = vsub.s32 0, %v252
    %v254 = vrot.slane %v250, %v253
    %v255 = vadd.f32 %v246, %v254
    %v256 = vadd.f32 %v247, %v254
    %v257 = vadd.f32 %v248, %v254
    %v258 = vld [vmem:[#allocation7] sm:$0xff]
    %v259 = vld [vmem:[#allocation7 + $0x8] sm:$0xff]
    %v260 = vld [vmem:[#allocation7 + $0x10] sm:$0xff]
    %v261 = vld [vmem:[#allocation7 + $0x18] sm:$0xff]
    %v262 = vld [vmem:[#allocation7 + $0x20] sm:$0xff]
    %v263 = vld [vmem:[#allocation7 + $0x28] sm:$0xff]
    %v264 = vld [vmem:[#allocation7 + $0x30] sm:$0xff]
    %v265 = vld [vmem:[#allocation7 + $0x38] sm:$0xff]
    %v266 = vld [vmem:[#allocation7 + $0x40] sm:$0xff]
    %v267 = vld [vmem:[#allocation7 + $0x48] sm:$0xff]
    %v268 = vld [vmem:[#allocation7 + $0x50] sm:$0xff]
    %v269 = vld [vmem:[#allocation7 + $0x58] sm:$0xff]
    %v270 = vld [vmem:[#allocation7 + $0x60] sm:$0xff]
    %v271 = vld [vmem:[#allocation7 + $0x68] sm:$0xff]
    %v272 = vld [vmem:[#allocation7 + $0x70] sm:$0xff]
    %v273 = vld [vmem:[#allocation7 + $0x78] sm:$0xff]
    %v274 = vld [vmem:[#allocation10 + $0x3] sm:$0x1]
    %v275 = vlaneseq
    %v276 = vshrl.u32 %v275, 7
    %v277 = vsub.s32 0, %v276
    %v278 = vrot.slane %v274, %v277
    %279 = vmatprep.subr.mxu0 0.0
    %280 = vmatpush1.msra.mxu0 %v273
    %281 = vmatprep.subr.mxu0 0.0
    %282 = vmatpush1.msra.mxu0 %v272
    %283 = vmatprep.subr.mxu0 0.0
    %284 = vmatpush1.msra.mxu0 %v271
    %285 = vmatprep.subr.mxu0 0.0
    %286 = vmatpush1.msra.mxu0 %v270
    %287 = vmatprep.subr.mxu0 0.0
    %288 = vmatpush1.msra.mxu0 %v269
    %289 = vmatprep.subr.mxu0 0.0
    %290 = vmatpush1.msra.mxu0 %v268
    %291 = vmatprep.subr.mxu0 0.0
    %292 = vmatpush1.msra.mxu0 %v267
    %293 = vmatprep.subr.mxu0 0.0
    %294 = vmatpush1.msra.mxu0 %v266
    %295 = vmatprep.subr.mxu0 0.0
    %296 = vmatpush1.msra.mxu0 %v265
    %297 = vmatprep.subr.mxu0 0.0
    %298 = vmatpush1.msra.mxu0 %v264
    %299 = vmatprep.subr.mxu0 0.0
    %300 = vmatpush1.msra.mxu0 %v263
    %301 = vmatprep.subr.mxu0 0.0
    %302 = vmatpush1.msra.mxu0 %v262
    %303 = vmatprep.subr.mxu0 0.0
    %304 = vmatpush1.msra.mxu0 %v261
    %305 = vmatprep.subr.mxu0 0.0
    %306 = vmatpush1.msra.mxu0 %v260
    %307 = vmatprep.subr.mxu0 0.0
    %308 = vmatpush1.msra.mxu0 %v259
    %309 = vmatprep.subr.mxu0 0.0
    %310 = vmatpush1.msra.mxu0 %v258
    %311 = vmatprep.subr.mxu0 0.0
    %312 = vmatpush2.msra.mxu0 0.0
    %313 = vmatprep.subr.mxu0 0.0
    %314 = vmatpush2.msra.mxu0 0.0
    %315 = vmatprep.subr.mxu0 0.0
    %316 = vmatpush2.msra.mxu0 0.0
    %317 = vmatprep.subr.mxu0 0.0
    %318 = vmatpush2.msra.mxu0 0.0
    %319 = vmatprep.subr.mxu0 0.0
    %320 = vmatpush2.msra.mxu0 0.0
    %321 = vmatprep.subr.mxu0 0.0
    %322 = vmatpush2.msra.mxu0 0.0
    %323 = vmatprep.subr.mxu0 0.0
    %324 = vmatpush2.msra.mxu0 0.0
    %325 = vmatprep.subr.mxu0 0.0
    %326 = vmatpush2.msra.mxu0 0.0
    %327 = vmatprep.subr.mxu0 0.0
    %328 = vmatpush2.msra.mxu0 0.0
    %329 = vmatprep.subr.mxu0 0.0
    %330 = vmatpush2.msra.mxu0 0.0
    %331 = vmatprep.subr.mxu0 0.0
    %332 = vmatpush2.msra.mxu0 0.0
    %333 = vmatprep.subr.mxu0 0.0
    %334 = vmatpush2.msra.mxu0 0.0
    %335 = vmatprep.subr.mxu0 0.0
    %336 = vmatpush2.msra.mxu0 0.0
    %337 = vmatprep.subr.mxu0 0.0
    %338 = vmatpush2.msra.mxu0 0.0
    %339 = vmatprep.subr.mxu0 0.0
    %340 = vmatpush2.msra.mxu0 0.0
    %341 = vmatprep.subr.mxu0 0.0
    %342 = vmatpush2.msra.mxu0 0.0
    %343 = vmatprep.mubr.f32.mxu0 0.0
    %344 = vmatmul.mubr.f32.gmra.mxu0 %v255
    %v345 = vpop.f32.mrf.mxu0
    %v346 = vadd.f32 %v278, %v345
    %v347 = vpop.f32.mrf.mxu0
    %348 = vmatprep.mubr.f32.mxu0 0.0
    %349 = vmatmul.mubr.f32.gmra.mxu0 %v256
    %v350 = vpop.f32.mrf.mxu0
    %v351 = vadd.f32 %v278, %v350
    %v352 = vpop.f32.mrf.mxu0
    %353 = vmatprep.mubr.f32.mxu0 0.0
    %354 = vmatmul.mubr.f32.gmra.mxu0 %v257
    %v355 = vpop.f32.mrf.mxu0
    %v356 = vadd.f32 %v278, %v355
    %v357 = vpop.f32.mrf.mxu0
    %358 = vdwg.mxu0
    %v359 = vmax.f32 %v346, 0.0
    %v360 = vmax.f32 %v351, 0.0
    %v361 = vmax.f32 %v356, 0.0
    %v362 = vld [vmem:[#allocation10 + $0x4] sm:$0x1]
    %v363 = vld [vmem:[#allocation10 + $0x5] sm:$0x1]
    %v364 = vsel %vm206, %v359, 0.0
    %v365 = vsel %vm207, %v360, 0.0
    %v366 = vsel %vm208, %v361, 0.0
    %v367 = vadd.f32 %v364, %v365
    %v368 = vadd.f32 %v367, %v366
    %v369 = vrot.slane %v368, 4
    %v370 = vadd.f32 %v368, %v369
    %v371 = vrot.slane %v370, 2
    %v372 = vadd.f32 %v370, %v371
    %v373 = vrot.slane %v372, 1
    %v374 = vadd.f32 %v372, %v373
    %v375 = vmul.f32 %v374, 0.05
    %v376 = vsub.f32 %v359, %v375
    %v377 = vsub.f32 %v360, %v375
    %v378 = vsub.f32 %v361, %v375
    %v379 = vsel %vm206, %v376, 0.0
    %v380 = vsel %vm207, %v377, 0.0
    %v381 = vsel %vm208, %v378, 0.0
    %v382 = vmul.f32 %v379, %v379
    %v383 = vmul.f32 %v380, %v380
    %v384 = vmul.f32 %v381, %v381
    %v385 = vadd.f32 %v382, %v383
    %v386 = vadd.f32 %v385, %v384
    %v387 = vrot.slane %v386, 4
    %v388 = vadd.f32 %v386, %v387
    %v389 = vrot.slane %v388, 2
    %v390 = vadd.f32 %v388, %v389
    %v391 = vrot.slane %v390, 1
    %v392 = vadd.f32 %v390, %v391
    %v393 = vmul.f32 %v392, 0.05
    %v394 = vadd.f32 %v393, 1e-05
    %v395 = vrsqrt.pop %v394
    %v396 = vmul.f32 %v362, %v395
    %v397 = vlaneseq
    %v398 = vshrl.u32 %v397, 7
    %v399 = vsub.s32 0, %v398
    %v400 = vrot.slane %v396, %v399
    %v401 = vmul.f32 %v359, %v400
    %v402 = vmul.f32 %v360, %v400
    %v403 = vmul.f32 %v361, %v400
    %v404 = vmul.f32 %v375, %v396
    %v405 = vsub.f32 %v363, %v404
    %v406 = vlaneseq
    %v407 = vshrl.u32 %v406, 7
    %v408 = vsub.s32 0, %v407
    %v409 = vrot.slane %v405, %v408
    %v410 = vadd.f32 %v401, %v409
    %v411 = vadd.f32 %v402, %v409
    %v412 = vadd.f32 %v403, %v409
    %v413 = vld [vmem:[#allocation8] sm:$0xff]
    %v414 = vld [vmem:[#allocation8 + $0x8] sm:$0xff]
    %v415 = vld [vmem:[#allocation8 + $0x10] sm:$0xff]
    %v416 = vld [vmem:[#allocation8 + $0x18] sm:$0xff]
    %v417 = vld [vmem:[#allocation8 + $0x20] sm:$0xff]
    %v418 = vld [vmem:[#allocation8 + $0x28] sm:$0xff]
    %v419 = vld [vmem:[#allocation8 + $0x30] sm:$0xff]
    %v420 = vld [vmem:[#allocation8 + $0x38] sm:$0xff]
    %v421 = vld [vmem:[#allocation8 + $0x40] sm:$0xff]
    %v422 = vld [vmem:[#allocation8 + $0x48] sm:$0xff]
    %v423 = vld [vmem:[#allocation8 + $0x50] sm:$0xff]
    %v424 = vld [vmem:[#allocation8 + $0x58] sm:$0xff]
    %v425 = vld [vmem:[#allocation8 + $0x60] sm:$0xff]
    %v426 = vld [vmem:[#allocation8 + $0x68] sm:$0xff]
    %v427 = vld [vmem:[#allocation8 + $0x70] sm:$0xff]
    %v428 = vld [vmem:[#allocation8 + $0x78] sm:$0xff]
    %v429 = vld [vmem:[#allocation10 + $0x6] sm:$0x1]
    %v430 = vlaneseq
    %v431 = vshrl.u32 %v430, 7
    %v432 = vsub.s32 0, %v431
    %v433 = vrot.slane %v429, %v432
    %434 = vmatprep.subr.mxu0 0.0
    %435 = vmatpush1.msra.mxu0 %v428
    %436 = vmatprep.subr.mxu0 0.0
    %437 = vmatpush1.msra.mxu0 %v427
    %438 = vmatprep.subr.mxu0 0.0
    %439 = vmatpush1.msra.mxu0 %v426
    %440 = vmatprep.subr.mxu0 0.0
    %441 = vmatpush1.msra.mxu0 %v425
    %442 = vmatprep.subr.mxu0 0.0
    %443 = vmatpush1.msra.mxu0 %v424
    %444 = vmatprep.subr.mxu0 0.0
    %445 = vmatpush1.msra.mxu0 %v423
    %446 = vmatprep.subr.mxu0 0.0
    %447 = vmatpush1.msra.mxu0 %v422
    %448 = vmatprep.subr.mxu0 0.0
    %449 = vmatpush1.msra.mxu0 %v421
    %450 = vmatprep.subr.mxu0 0.0
    %451 = vmatpush1.msra.mxu0 %v420
    %452 = vmatprep.subr.mxu0 0.0
    %453 = vmatpush1.msra.mxu0 %v419
    %454 = vmatprep.subr.mxu0 0.0
    %455 = vmatpush1.msra.mxu0 %v418
    %456 = vmatprep.subr.mxu0 0.0
    %457 = vmatpush1.msra.mxu0 %v417
    %458 = vmatprep.subr.mxu0 0.0
    %459 = vmatpush1.msra.mxu0 %v416
    %460 = vmatprep.subr.mxu0 0.0
    %461 = vmatpush1.msra.mxu0 %v415
    %462 = vmatprep.subr.mxu0 0.0
    %463 = vmatpush1.msra.mxu0 %v414
    %464 = vmatprep.subr.mxu0 0.0
    %465 = vmatpush1.msra.mxu0 %v413
    %466 = vmatprep.subr.mxu0 0.0
    %467 = vmatpush2.msra.mxu0 0.0
    %468 = vmatprep.subr.mxu0 0.0
    %469 = vmatpush2.msra.mxu0 0.0
    %470 = vmatprep.subr.mxu0 0.0
    %471 = vmatpush2.msra.mxu0 0.0
    %472 = vmatprep.subr.mxu0 0.0
    %473 = vmatpush2.msra.mxu0 0.0
    %474 = vmatprep.subr.mxu0 0.0
    %475 = vmatpush2.msra.mxu0 0.0
    %476 = vmatprep.subr.mxu0 0.0
    %477 = vmatpush2.msra.mxu0 0.0
    %478 = vmatprep.subr.mxu0 0.0
    %479 = vmatpush2.msra.mxu0 0.0
    %480 = vmatprep.subr.mxu0 0.0
    %481 = vmatpush2.msra.mxu0 0.0
    %482 = vmatprep.subr.mxu0 0.0
    %483 = vmatpush2.msra.mxu0 0.0
    %484 = vmatprep.subr.mxu0 0.0
    %485 = vmatpush2.msra.mxu0 0.0
    %486 = vmatprep.subr.mxu0 0.0
    %487 = vmatpush2.msra.mxu0 0.0
    %488 = vmatprep.subr.mxu0 0.0
    %489 = vmatpush2.msra.mxu0 0.0
    %490 = vmatprep.subr.mxu0 0.0
    %491 = vmatpush2.msra.mxu0 0.0
    %492 = vmatprep.subr.mxu0 0.0
    %493 = vmatpush2.msra.mxu0 0.0
    %494 = vmatprep.subr.mxu0 0.0
    %495 = vmatpush2.msra.mxu0 0.0
    %496 = vmatprep.subr.mxu0 0.0
    %497 = vmatpush2.msra.mxu0 0.0
    %498 = vmatprep.mubr.f32.mxu0 0.0
    %499 = vmatmul.mubr.f32.gmra.mxu0 %v410
    %v500 = vpop.f32.mrf.mxu0
    %v501 = vadd.f32 %v433, %v500
    %v502 = vpop.f32.mrf.mxu0
    %503 = vmatprep.mubr.f32.mxu0 0.0
    %504 = vmatmul.mubr.f32.gmra.mxu0 %v411
    %v505 = vpop.f32.mrf.mxu0
    %v506 = vadd.f32 %v433, %v505
    %v507 = vpop.f32.mrf.mxu0
    %508 = vmatprep.mubr.f32.mxu0 0.0
    %509 = vmatmul.mubr.f32.gmra.mxu0 %v412
    %v510 = vpop.f32.mrf.mxu0
    %v511 = vadd.f32 %v433, %v510
    %v512 = vpop.f32.mrf.mxu0
    %513 = vdwg.mxu0
    %v514 = vxor.u32 %v501, 2147483648
    %v515 = vxor.u32 %v506, 2147483648
    %v516 = vxor.u32 %v511, 2147483648
    %v517 = vmul.f32 %v514, 1.442695
    %v518 = vpow.pop %v517
    %v519 = vmul.f32 %v515, 1.442695
    %v520 = vpow.pop %v519
    %v521 = vmul.f32 %v516, 1.442695
    %v522 = vpow.pop %v521
    %v523 = vadd.f32 %v518, 1.0
    %v524 = vadd.f32 %v520, 1.0
    %v525 = vadd.f32 %v522, 1.0
    %v526 = vrcp.pop %v523
    %v527 = vmul.f32 1.0, %v526
    %v528 = vrcp.pop %v524
    %v529 = vmul.f32 1.0, %v528
    %v530 = vrcp.pop %v525
    %v531 = vmul.f32 1.0, %v530
    %532 = vst [vmem:[#allocation11] sm:$0xff] %v527
    %533 = vst [vmem:[#allocation11 + $0x8] sm:$0xff] %v529
    %534 = vst [vmem:[#allocation11 + $0x10] sm:$0xff] %v531
    // Predicated region
    $region42: #{tpu_custom_call.1} parent=1 // pred_check
      _
    $region43: #{tpu_custom_call.1} parent=1 // pred_check_branch
      %536 = sbr.rel (0) target = $region45
    $region44: #{tpu_custom_call.1} parent=1 // pred_region
      %s538 = ssub.s32 384, 384
      %539 = vsyncadd [#allocation4], %s538
      %s540 = sshll.u32 [#allocation11], 4
      %s541 = int_to_ptr.vmem [resolvable:$true] %s540
      %546 = dma.vmem_to_hbm [thread:$0]  %s541, 384, %s5, [#allocation4], 128, 128, 8
    $region45: #{tpu_custom_call.1} parent=1 // pred_fallthru
      _
    // Predicated region
    $region46: #{tpu_custom_call.1} parent=1 // pred_check
      _
    $region47: #{tpu_custom_call.1} parent=1 // pred_check_branch
      %548 = sbr.rel (0) target = $region49
    $region48: #{tpu_custom_call.1} parent=1 // pred_region
      %549 = dma.done [#allocation4], 384
    $region49: #{tpu_custom_call.1} parent=1 // pred_fallthru
      _
    %550 = vsyncpa [#allocation3], 1
    %551 = vsyncpa [#allocation6], 1
    %552 = vsyncpa [#allocation9], 1
    %553 = vsyncpa [#allocation4], 1

</llo_original>
